<compile_context>
chip_gen: v7x
topology: tpu7x:2x2x1
jax: 0.10.0
libtpu: 0.0.40
codegen_flags: <defaults>
</compile_context>

<pallas_src>
import jax
import jax.numpy as jnp
from jax import lax
from jax.experimental import pallas as pl
from jax.experimental.pallas import tpu as pltpu


# Conservative budget for keeping the whole table VMEM-resident (vs. v7x's
# 32 MiB scoped / 64 MiB physical VMEM, leaving room for output double-buffers).
_VMEM_TABLE_BUDGET_BYTES = 20 << 20


def _vmem_gather_kernel(labels_ref, table_ref, out_ref):
    # labels_ref: SMEM [B_pad] int32 scalar-prefetch
    # table_ref : VMEM [R, H_pad] whole table (constant index_map -> one fetch)
    # out_ref   : VMEM [TB, H_pad] output chunk for this grid step
    tb = out_ref.shape[0]
    base = pl.program_id(0) * tb

    def copy_row(t, carry):
        out_ref[t, :] = table_ref[labels_ref[base + t], :]
        return carry

    lax.fori_loop(0, tb, copy_row, 0, unroll=True)


def _hbm_gather_kernel(labels_ref, table_hbm_ref, out_ref, sem_ref):
    # labels_ref   : SMEM [B_pad] int32 scalar-prefetch
    # table_hbm_ref: HBM [R, H_pad] (memory_space=pl.ANY) -- manual DMA gather
    # out_ref      : VMEM [TB, H_pad] output chunk
    # sem_ref      : DMA semaphores [TB]
    tb = out_ref.shape[0]
    base = pl.program_id(0) * tb

    def start(t, carry):
        lbl = labels_ref[base + t]
        pltpu.make_async_copy(
            table_hbm_ref.at[lbl], out_ref.at[t], sem_ref.at[t]
        ).start()
        return carry

    lax.fori_loop(0, tb, start, 0, unroll=True)

    def wait(t, carry):
        pltpu.make_async_copy(
            table_hbm_ref.at[0], out_ref.at[t], sem_ref.at[t]
        ).wait()
        return carry

    lax.fori_loop(0, tb, wait, 0, unroll=True)


def _pick_batch_tile(batch):
    """Rows per grid step: multiple of 8 (sublane-dense f32), >= 2 grid steps
    when the batch allows (v7x megacore), capped at 64."""
    if batch <= 8:
        return 8
    tb = ((batch + 1) // 2 + 7) // 8 * 8
    return int(max(8, min(64, tb)))


def label_embed_pallas(labels, table_padded, hidden_size, *, force_hbm_gather=False):
    """Gather rows of a lane-dense (H_pad % 128 == 0) embedding table.

    labels       : int [B]
    table_padded : float [R, H_pad]
    returns      : float [B, hidden_size]
    """
    B = labels.shape[0]
    R, H_pad = table_padded.shape
    dtype = table_padded.dtype
    itemsize = jnp.dtype(dtype).itemsize

    # Clamp: neither gather path has an OOB check on TPU.
    # TODO(synk): PyTorch nn.Embedding raises on out-of-range labels; clamping
    # silently maps them to a valid row instead.
    labels_i32 = jnp.clip(labels.astype(jnp.int32), 0, R - 1)

    TB = _pick_batch_tile(B)
    steps = pl.cdiv(B, TB)
    B_pad = steps * TB
    if B_pad != B:
        labels_i32 = jnp.pad(labels_i32, (0, B_pad - B))  # pad with valid label 0

    table_bytes = R * H_pad * itemsize
    out_block_bytes = TB * H_pad * itemsize
    use_vmem_table = (not force_hbm_gather) and (
        table_bytes + 2 * out_block_bytes <= _VMEM_TABLE_BUDGET_BYTES
    )

    bytes_accessed = B_pad * H_pad * itemsize * 2 + B_pad * 4
    if use_vmem_table:
        bytes_accessed += table_bytes
    cost = pl.CostEstimate(flops=0, transcendentals=0, bytes_accessed=bytes_accessed)

    if use_vmem_table:
        # Whole table VMEM-resident, fetched once (constant index_map).
        vmem_limit = min(100 << 20, table_bytes + 4 * out_block_bytes + (4 << 20))
        out = pl.pallas_call(
            _vmem_gather_kernel,
            out_shape=jax.ShapeDtypeStruct((B_pad, H_pad), dtype),
            grid_spec=pltpu.PrefetchScalarGridSpec(
                num_scalar_prefetch=1,
                grid=(steps,),
                in_specs=[pl.BlockSpec((R, H_pad), lambda i, labels: (0, 0))],
                out_specs=pl.BlockSpec((TB, H_pad), lambda i, labels: (i, 0)),
            ),
            compiler_params=pltpu.CompilerParams(
                dimension_semantics=("parallel",),
                vmem_limit_bytes=vmem_limit,
            ),
            cost_estimate=cost,
        )(labels_i32, table_padded)
    else:
        # Large-table fallback: manual per-row DMA gather from HBM, TB DMAs in
        # flight per grid step.
        out = pl.pallas_call(
            _hbm_gather_kernel,
            out_shape=jax.ShapeDtypeStruct((B_pad, H_pad), dtype),
            grid_spec=pltpu.PrefetchScalarGridSpec(
                num_scalar_prefetch=1,
                grid=(steps,),
                in_specs=[pl.BlockSpec(memory_space=pl.ANY)],
                out_specs=pl.BlockSpec((TB, H_pad), lambda i, labels: (i, 0)),
                scratch_shapes=[pltpu.SemaphoreType.DMA((TB,))],
            ),
            compiler_params=pltpu.CompilerParams(
                dimension_semantics=("parallel",),
            ),
            cost_estimate=cost,
        )(labels_i32, table_padded)

    if B_pad != B or H_pad != hidden_size:
        out = out[:B, :hidden_size]
    return out


class LabelEmbedder:
    """JAX/Pallas port of the PyTorch LabelEmbedder module."""

    def __init__(self, num_classes, hidden_size, dropout_prob, *, key,
                 dtype=jnp.float32):
        use_cfg_embedding = int(dropout_prob > 0)
        self.num_classes = num_classes
        self.hidden_size = hidden_size
        self.dropout_prob = dropout_prob
        # nn.init.normal_(weight, std=0.02)
        table = 0.02 * jax.random.normal(
            key, (num_classes + use_cfg_embedding, hidden_size), dtype=jnp.float32
        )
        self.embedding_table = table.astype(dtype)
        # Pad to a lane-dense hidden size ONCE at init (free for 768/1152/1536).
        h_pad = ((hidden_size + 127) // 128) * 128
        if h_pad == hidden_size:
            self._table_padded = self.embedding_table
        else:
            self._table_padded = jnp.pad(
                self.embedding_table, ((0, 0), (0, h_pad - hidden_size))
            )

    def token_drop(self, labels, rng=None, force_drop_ids=None):
        if force_drop_ids is None:
            drop_ids = jax.random.uniform(rng, (labels.shape[0],)) < self.dropout_prob
        else:
            drop_ids = force_drop_ids == 1
        return jnp.where(drop_ids, self.num_classes, labels)

    def __call__(self, labels, train, rng=None, force_drop_ids=None):
        use_dropout = self.dropout_prob > 0
        if (train and use_dropout) or (force_drop_ids is not None):
            if force_drop_ids is None and rng is None:
                raise ValueError(
                    "rng is required when train=True and dropout_prob > 0"
                )
            labels = self.token_drop(labels, rng, force_drop_ids)
        return label_embed_pallas(labels, self._table_padded, self.hidden_size)


if __name__ == "__main__":
    num_classes = 10
    hidden_size = 32
    dropout_prob = 0.1
    batch = 8

    root = jax.random.PRNGKey(0)
    k_table, k_labels, k_drop = jax.random.split(root, 3)

    embedder = LabelEmbedder(num_classes, hidden_size, dropout_prob, key=k_table)
    labels = jax.random.randint(k_labels, (batch,), 0, num_classes, dtype=jnp.int32)

    # ---- eval mode (no dropout): pure embedding lookup (VMEM-resident path) ----
    out_eval = embedder(labels, train=False)
    out_eval = jax.block_until_ready(out_eval)
    ref_eval = jnp.take(embedder.embedding_table, labels, axis=0)
    assert out_eval.shape == (batch, hidden_size)
    assert jnp.allclose(out_eval, ref_eval, atol=1e-6), "eval-mode mismatch"

    # ---- train mode with forced drop ids (deterministic CFG dropout path) ----
    force_drop_ids = jnp.array([1, 0, 0, 1, 0, 0, 0, 1], dtype=jnp.int32)
    out_train = embedder(labels, train=True, rng=k_drop, force_drop_ids=force_drop_ids)
    out_train = jax.block_until_ready(out_train)
    dropped_labels = jnp.where(force_drop_ids == 1, num_classes, labels)
    ref_train = jnp.take(embedder.embedding_table, dropped_labels, axis=0)
    assert jnp.allclose(out_train, ref_train, atol=1e-6), "train-mode mismatch"

    # ---- train mode with RNG dropout (just check it runs + shape) ----
    out_rng = embedder(labels, train=True, rng=k_drop)
    out_rng = jax.block_until_ready(out_rng)
    assert out_rng.shape == (batch, hidden_size)

    # ---- large-table fallback path (manual HBM DMA gather), forced here ----
    out_hbm = label_embed_pallas(
        labels, embedder._table_padded, hidden_size, force_hbm_gather=True
    )
    out_hbm = jax.block_until_ready(out_hbm)
    assert jnp.allclose(out_hbm, ref_eval, atol=1e-6), "hbm-gather mismatch"

    print("KERNEL_OK")
</pallas_src>

<mosaic_0001>
module attributes {stable_mosaic.version = 11 : i64} {
  func.func @_vmem_gather_kernel(%arg0: i32, %arg1: memref<8xi32, #tpu.memory_space<smem>>, %arg2: memref<11x128xf32, #tpu.memory_space<vmem>>, %arg3: memref<8x128xf32, #tpu.memory_space<vmem>>) attributes {dimension_semantics = [#tpu.dimension_semantics<parallel>], iteration_bounds = array<i64: 1>, scalar_prefetch = 1 : i64, scratch_operands = 0 : i64, tpu.core_type = #tpu.core_type<tc>, window_params = [{pipeline_mode = #tpu.pipeline_mode<synchronous>, transform_indices = @transform_0, window_bounds = array<i64: 11, 128>}, {transform_indices = @transform_1, window_bounds = array<i64: 8, 128>}]} {
    %c8_i32 = arith.constant 8 : i32
    %0 = arith.muli %arg0, %c8_i32 : i32
    %c0_i32 = arith.constant 0 : i32
    %1 = arith.addi %0, %c0_i32 : i32
    %2 = arith.index_cast %1 : i32 to index
    %3 = memref.load %arg1[%2] : memref<8xi32, #tpu.memory_space<smem>>
    %4 = arith.index_cast %3 : i32 to index
    %c0 = arith.constant 0 : index
    %5 = vector.load %arg2[%4, %c0] : memref<11x128xf32, #tpu.memory_space<vmem>>, vector<1x128xf32>
    %6 = vector.shape_cast %5 : vector<1x128xf32> to vector<128xf32>
    %7 = arith.index_cast %c0_i32 : i32 to index
    %c0_0 = arith.constant 0 : index
    %8 = vector.load %arg3[%7, %c0_0] : memref<8x128xf32, #tpu.memory_space<vmem>>, vector<1x128xf32>
    %9 = vector.shape_cast %8 : vector<1x128xf32> to vector<128xf32>
    %10 = vector.shape_cast %6 : vector<128xf32> to vector<1x128xf32>
    tpu.vector_store %arg3[%7, %c0_0], %10 {strides = array<i32>} : memref<8x128xf32, #tpu.memory_space<vmem>>, vector<1x128xf32>,
    %c1_i32 = arith.constant 1 : i32
    %11 = arith.addi %0, %c1_i32 : i32
    %12 = arith.index_cast %11 : i32 to index
    %13 = memref.load %arg1[%12] : memref<8xi32, #tpu.memory_space<smem>>
    %14 = arith.index_cast %13 : i32 to index
    %c0_1 = arith.constant 0 : index
    %15 = vector.load %arg2[%14, %c0_1] : memref<11x128xf32, #tpu.memory_space<vmem>>, vector<1x128xf32>
    %16 = vector.shape_cast %15 : vector<1x128xf32> to vector<128xf32>
    %17 = arith.index_cast %c1_i32 : i32 to index
    %c0_2 = arith.constant 0 : index
    %18 = vector.load %arg3[%17, %c0_2] : memref<8x128xf32, #tpu.memory_space<vmem>>, vector<1x128xf32>
    %19 = vector.shape_cast %18 : vector<1x128xf32> to vector<128xf32>
    %20 = vector.shape_cast %16 : vector<128xf32> to vector<1x128xf32>
    tpu.vector_store %arg3[%17, %c0_2], %20 {strides = array<i32>} : memref<8x128xf32, #tpu.memory_space<vmem>>, vector<1x128xf32>,
    %c2_i32 = arith.constant 2 : i32
    %21 = arith.addi %0, %c2_i32 : i32
    %22 = arith.index_cast %21 : i32 to index
    %23 = memref.load %arg1[%22] : memref<8xi32, #tpu.memory_space<smem>>
    %24 = arith.index_cast %23 : i32 to index
    %c0_3 = arith.constant 0 : index
    %25 = vector.load %arg2[%24, %c0_3] : memref<11x128xf32, #tpu.memory_space<vmem>>, vector<1x128xf32>
    %26 = vector.shape_cast %25 : vector<1x128xf32> to vector<128xf32>
    %27 = arith.index_cast %c2_i32 : i32 to index
    %c0_4 = arith.constant 0 : index
    %28 = vector.load %arg3[%27, %c0_4] : memref<8x128xf32, #tpu.memory_space<vmem>>, vector<1x128xf32>
    %29 = vector.shape_cast %28 : vector<1x128xf32> to vector<128xf32>
    %30 = vector.shape_cast %26 : vector<128xf32> to vector<1x128xf32>
    tpu.vector_store %arg3[%27, %c0_4], %30 {strides = array<i32>} : memref<8x128xf32, #tpu.memory_space<vmem>>, vector<1x128xf32>,
    %c3_i32 = arith.constant 3 : i32
    %31 = arith.addi %0, %c3_i32 : i32
    %32 = arith.index_cast %31 : i32 to index
    %33 = memref.load %arg1[%32] : memref<8xi32, #tpu.memory_space<smem>>
    %34 = arith.index_cast %33 : i32 to index
    %c0_5 = arith.constant 0 : index
    %35 = vector.load %arg2[%34, %c0_5] : memref<11x128xf32, #tpu.memory_space<vmem>>, vector<1x128xf32>
    %36 = vector.shape_cast %35 : vector<1x128xf32> to vector<128xf32>
    %37 = arith.index_cast %c3_i32 : i32 to index
    %c0_6 = arith.constant 0 : index
    %38 = vector.load %arg3[%37, %c0_6] : memref<8x128xf32, #tpu.memory_space<vmem>>, vector<1x128xf32>
    %39 = vector.shape_cast %38 : vector<1x128xf32> to vector<128xf32>
    %40 = vector.shape_cast %36 : vector<128xf32> to vector<1x128xf32>
    tpu.vector_store %arg3[%37, %c0_6], %40 {strides = array<i32>} : memref<8x128xf32, #tpu.memory_space<vmem>>, vector<1x128xf32>,
    %c4_i32 = arith.constant 4 : i32
    %41 = arith.addi %0, %c4_i32 : i32
    %42 = arith.index_cast %41 : i32 to index
    %43 = memref.load %arg1[%42] : memref<8xi32, #tpu.memory_space<smem>>
    %44 = arith.index_cast %43 : i32 to index
    %c0_7 = arith.constant 0 : index
    %45 = vector.load %arg2[%44, %c0_7] : memref<11x128xf32, #tpu.memory_space<vmem>>, vector<1x128xf32>
    %46 = vector.shape_cast %45 : vector<1x128xf32> to vector<128xf32>
    %47 = arith.index_cast %c4_i32 : i32 to index
    %c0_8 = arith.constant 0 : index
    %48 = vector.load %arg3[%47, %c0_8] : memref<8x128xf32, #tpu.memory_space<vmem>>, vector<1x128xf32>
    %49 = vector.shape_cast %48 : vector<1x128xf32> to vector<128xf32>
    %50 = vector.shape_cast %46 : vector<128xf32> to vector<1x128xf32>
    tpu.vector_store %arg3[%47, %c0_8], %50 {strides = array<i32>} : memref<8x128xf32, #tpu.memory_space<vmem>>, vector<1x128xf32>,
    %c5_i32 = arith.constant 5 : i32
    %51 = arith.addi %0, %c5_i32 : i32
    %52 = arith.index_cast %51 : i32 to index
    %53 = memref.load %arg1[%52] : memref<8xi32, #tpu.memory_space<smem>>
    %54 = arith.index_cast %53 : i32 to index
    %c0_9 = arith.constant 0 : index
    %55 = vector.load %arg2[%54, %c0_9] : memref<11x128xf32, #tpu.memory_space<vmem>>, vector<1x128xf32>
    %56 = vector.shape_cast %55 : vector<1x128xf32> to vector<128xf32>
    %57 = arith.index_cast %c5_i32 : i32 to index
    %c0_10 = arith.constant 0 : index
    %58 = vector.load %arg3[%57, %c0_10] : memref<8x128xf32, #tpu.memory_space<vmem>>, vector<1x128xf32>
    %59 = vector.shape_cast %58 : vector<1x128xf32> to vector<128xf32>
    %60 = vector.shape_cast %56 : vector<128xf32> to vector<1x128xf32>
    tpu.vector_store %arg3[%57, %c0_10], %60 {strides = array<i32>} : memref<8x128xf32, #tpu.memory_space<vmem>>, vector<1x128xf32>,
    %c6_i32 = arith.constant 6 : i32
    %61 = arith.addi %0, %c6_i32 : i32
    %62 = arith.index_cast %61 : i32 to index
    %63 = memref.load %arg1[%62] : memref<8xi32, #tpu.memory_space<smem>>
    %64 = arith.index_cast %63 : i32 to index
    %c0_11 = arith.constant 0 : index
    %65 = vector.load %arg2[%64, %c0_11] : memref<11x128xf32, #tpu.memory_space<vmem>>, vector<1x128xf32>
    %66 = vector.shape_cast %65 : vector<1x128xf32> to vector<128xf32>
    %67 = arith.index_cast %c6_i32 : i32 to index
    %c0_12 = arith.constant 0 : index
    %68 = vector.load %arg3[%67, %c0_12] : memref<8x128xf32, #tpu.memory_space<vmem>>, vector<1x128xf32>
    %69 = vector.shape_cast %68 : vector<1x128xf32> to vector<128xf32>
    %70 = vector.shape_cast %66 : vector<128xf32> to vector<1x128xf32>
    tpu.vector_store %arg3[%67, %c0_12], %70 {strides = array<i32>} : memref<8x128xf32, #tpu.memory_space<vmem>>, vector<1x128xf32>,
    %c7_i32 = arith.constant 7 : i32
    %71 = arith.addi %0, %c7_i32 : i32
    %72 = arith.index_cast %71 : i32 to index
    %73 = memref.load %arg1[%72] : memref<8xi32, #tpu.memory_space<smem>>
    %74 = arith.index_cast %73 : i32 to index
    %c0_13 = arith.constant 0 : index
    %75 = vector.load %arg2[%74, %c0_13] : memref<11x128xf32, #tpu.memory_space<vmem>>, vector<1x128xf32>
    %76 = vector.shape_cast %75 : vector<1x128xf32> to vector<128xf32>
    %77 = arith.index_cast %c7_i32 : i32 to index
    %c0_14 = arith.constant 0 : index
    %78 = vector.load %arg3[%77, %c0_14] : memref<8x128xf32, #tpu.memory_space<vmem>>, vector<1x128xf32>
    %79 = vector.shape_cast %78 : vector<1x128xf32> to vector<128xf32>
    %80 = vector.shape_cast %76 : vector<128xf32> to vector<1x128xf32>
    tpu.vector_store %arg3[%77, %c0_14], %80 {strides = array<i32>} : memref<8x128xf32, #tpu.memory_space<vmem>>, vector<1x128xf32>,
    %c8_i32_15 = arith.constant 8 : i32
    return
  }
  func.func @transform_0(%arg0: i32, %arg1: memref<8xi32, #tpu.memory_space<smem>>) -> (i32, i32) {
    %c0_i32 = arith.constant 0 : i32
    %c0_i32_0 = arith.constant 0 : i32
    %c0_i32_1 = arith.constant 0 : i32
    return %c0_i32, %c0_i32_0 : i32, i32
  }
  func.func @transform_1(%arg0: i32, %arg1: memref<8xi32, #tpu.memory_space<smem>>) -> (i32, i32) {
    %c0_i32 = arith.constant 0 : i32
    %c0_i32_0 = arith.constant 0 : i32
    return %arg0, %c0_i32 : i32, i32
  }
}

</mosaic_0001>

<llo_original>
// kernel: tpu_custom_call.1
$region0: #{tpu_custom_call.1}
  #allocation0 [shape = 'u32[]', space=smem, size = 0x4, offset = 0x4, fixed_abs, tag = 'smem constant byte address 0x4 - core index']
  #allocation1 [shape = 'u32[144,128]{1,0:T(1,128)}', space=vmem, size = 0x12000, scoped, tag = 'internal scratch']
  #allocation2 [shape = 's32[1]{0}', space=sflag, size = 0x4, scoped, tag = 'scoped memory for tpu_custom_call.1']
  #allocation3 [shape = 'u8[512]{0}', space=smem, size = 0x200, scoped, tag = 'prefetched SMEM operand 0']
  %s0 = inlined_call_operand.hbm [shape: s32[8], index: 0, kind: input, shape index: {}]
  %s1 = inlined_call_operand.hbm [shape: f32[11,128], index: 1, kind: input, shape index: {}]
  %s2 = inlined_call_operand.hbm [shape: f32[8,128], index: 2, kind: output, shape index: {}]
  %s3 = sld [smem:[#allocation0]]
  $region18: #{tpu_custom_call.1} parent=0
    _
  %s5 = ssub.s32 1, %s3
  %s6 = scalar_select 0, %s5, %s3
  %8 = dma.hbm_to_smem %s0, 16, [#allocation3], [#allocation2]
  %9 = dma.done [#allocation2], 16
  %10 = sfence
  $region1: #{tpu_custom_call.1} parent=0
    #allocation4 [shape = 'u8[8192]{0}', space=vmem, size = 0x2000, scoped, tag = 'input window, operand 1, single buffered']
    #allocation5 [shape = 's32[1]{0}', space=sflag, size = 0x4, scoped, tag = 'scoped memory for tpu_custom_call.1']
    #allocation6 [shape = 's32[1]{0}', space=sflag, size = 0x4, scoped, tag = 'scoped memory for tpu_custom_call.1']
    #allocation7 [shape = 'u8[4096]{0}', space=vmem, size = 0x1000, scoped, tag = 'output window, operand 0, single buffered']
    %11 = vsyncpa [#allocation5], 0
    %12 = vsyncpa [#allocation6], 0
    // Predicated region
    $region2: #{tpu_custom_call.1} parent=1 // pred_check
      _
    $region3: #{tpu_custom_call.1} parent=1 // pred_check_branch
      %14 = sbr.rel (0) target = $region5
    $region4: #{tpu_custom_call.1} parent=1 // pred_region
      %s16 = ssub.s32 256, 256
      %17 = vsyncadd [#allocation5], %s16
      %s18 = sshll.u32 [#allocation4], 4
      %s19 = int_to_ptr.vmem [resolvable:$true] %s18
      %24 = dma.hbm_to_vmem [thread:$0]  %s1, 256, %s19, [#allocation5], 128, 128, 8
    $region5: #{tpu_custom_call.1} parent=1 // pred_fallthru
      _
    // Predicated region
    $region6: #{tpu_custom_call.1} parent=1 // pred_check
      _
    $region7: #{tpu_custom_call.1} parent=1 // pred_check_branch
      %26 = sbr.rel (0) target = $region9
    $region8: #{tpu_custom_call.1} parent=1 // pred_region
      %27 = dma.done [#allocation5], 256
    $region9: #{tpu_custom_call.1} parent=1 // pred_fallthru
      _
    %s28 = smul.u32 0, 8
    %s29 = sld [smem:[#allocation3 + %s28]]
    %s30 = scalar_lea.vmem [#allocation4], %s29
    %v31 = vld [vmem:[%s30] sm:$0x1]
    %32 = vst [vmem:[#allocation7] sm:$0x1] %v31
    %s33 = sadd.s32 %s28, 1
    %s34 = sld [smem:[#allocation3 + %s33]]
    %s35 = scalar_lea.vmem [#allocation4], %s34
    %v36 = vld [vmem:[%s35] sm:$0x1]
    %37 = vst [vmem:[#allocation7 + $0x1] sm:$0x1] %v36
    %s38 = sadd.s32 %s28, 2
    %s39 = sld [smem:[#allocation3 + %s38]]
    %s40 = scalar_lea.vmem [#allocation4], %s39
    %v41 = vld [vmem:[%s40] sm:$0x1]
    %42 = vst [vmem:[#allocation7 + $0x2] sm:$0x1] %v41
    %s43 = sadd.s32 %s28, 3
    %s44 = sld [smem:[#allocation3 + %s43]]
    %s45 = scalar_lea.vmem [#allocation4], %s44
    %v46 = vld [vmem:[%s45] sm:$0x1]
    %47 = vst [vmem:[#allocation7 + $0x3] sm:$0x1] %v46
    %s48 = sadd.s32 %s28, 4
    %s49 = sld [smem:[#allocation3 + %s48]]
    %s50 = scalar_lea.vmem [#allocation4], %s49
    %v51 = vld [vmem:[%s50] sm:$0x1]
    %52 = vst [vmem:[#allocation7 + $0x4] sm:$0x1] %v51
    %s53 = sadd.s32 %s28, 5
    %s54 = sld [smem:[#allocation3 + %s53]]
    %s55 = scalar_lea.vmem [#allocation4], %s54
    %v56 = vld [vmem:[%s55] sm:$0x1]
    %57 = vst [vmem:[#allocation7 + $0x5] sm:$0x1] %v56
    %s58 = sadd.s32 %s28, 6
    %s59 = sld [smem:[#allocation3 + %s58]]
    %s60 = scalar_lea.vmem [#allocation4], %s59
    %v61 = vld [vmem:[%s60] sm:$0x1]
    %62 = vst [vmem:[#allocation7 + $0x6] sm:$0x1] %v61
    %s63 = sadd.s32 %s28, 7
    %s64 = sld [smem:[#allocation3 + %s63]]
    %s65 = scalar_lea.vmem [#allocation4], %s64
    %v66 = vld [vmem:[%s65] sm:$0x1]
    %67 = vst [vmem:[#allocation7 + $0x7] sm:$0x1] %v66
    // Predicated region
    $region10: #{tpu_custom_call.1} parent=1 // pred_check
      _
    $region11: #{tpu_custom_call.1} parent=1 // pred_check_branch
      %69 = sbr.rel (0) target = $region13
    $region12: #{tpu_custom_call.1} parent=1 // pred_region
      %s71 = ssub.s32 128, 128
      %72 = vsyncadd [#allocation6], %s71
      %s74 = sshll.u32 [#allocation7], 4
      %s75 = int_to_ptr.vmem [resolvable:$true] %s74
      %77 = dma.vmem_to_hbm [thread:$0]  %s75, 128, %s2, [#allocation6]
    $region13: #{tpu_custom_call.1} parent=1 // pred_fallthru
      _
    // Predicated region
    $region14: #{tpu_custom_call.1} parent=1 // pred_check
      _
    $region15: #{tpu_custom_call.1} parent=1 // pred_check_branch
      %79 = sbr.rel (0) target = $region17
    $region16: #{tpu_custom_call.1} parent=1 // pred_region
      %80 = dma.done [#allocation6], 128
    $region17: #{tpu_custom_call.1} parent=1 // pred_fallthru
      _
    %81 = vsyncpa [#allocation5], 1
    %82 = vsyncpa [#allocation6], 1

</llo_original>
